<compile_context>
chip_gen: v5e
topology: v5e:2x2
jax: 0.10.0
libtpu: 0.0.40
codegen_flags: <defaults>
</compile_context>

<pallas_src>
import functools

import jax
import jax.numpy as jnp
from jax.experimental import pallas as pl
from jax.experimental.pallas import tpu as pltpu

C_MID = 128                       # Conv1d output channels (fixed by the module)
_FUSED_GATHER_MAX_VOCAB = 2048    # one-hot in-kernel gather only for small vocabs


# ------------------------------- kernels -------------------------------------

def _conv_fc_body(x, wc_ref, wfc_ref, bias_ref, out_ref, seq_len):
    """Shared conv + ReLU + FC body.  x: (TILE_R, E) bf16 rows; the block holds
    an integer number of whole sequences of length seq_len."""
    R = x.shape[0]
    n_cls = out_ref.shape[-1]

    # All three conv taps in one MXU pass: (R, E) @ (E, 3*128), f32 accumulate.
    taps = jnp.dot(x, wc_ref[...], preferred_element_type=jnp.float32)
    a = taps[:, 0 * C_MID:1 * C_MID]   # tap k=0: weight applied to x[s-1]
    b = taps[:, 1 * C_MID:2 * C_MID]   # tap k=1: weight applied to x[s]
    c = taps[:, 2 * C_MID:3 * C_MID]   # tap k=2: weight applied to x[s+1]

    # Per-sequence boundary masks (several sequences share one block of rows).
    row = jax.lax.broadcasted_iota(jnp.int32, (R, 1), 0)
    pos = row % seq_len
    first = pos == 0
    last = pos == seq_len - 1

    # conv[r] = a[r-1] + b[r] + c[r+1] with zero padding at sequence edges.
    # pltpu.roll requires non-negative shifts: roll by R-1 == roll by -1.
    a_shift = jnp.where(first, 0.0, pltpu.roll(a, shift=1, axis=0))
    c_shift = jnp.where(last, 0.0, pltpu.roll(c, shift=R - 1, axis=0))

    conv = a_shift + b + c_shift + bias_ref[0:1, :]     # (R, 128) f32
    h = jnp.maximum(conv, 0.0)                          # ReLU; dropout = identity (eval)

    # FC to the (small) padded class width, f32 accumulate + f32 bias.
    y = jnp.dot(h.astype(wfc_ref.dtype), wfc_ref[...],
                preferred_element_type=jnp.float32) + bias_ref[1:2, :n_cls]
    out_ref[...] = y.astype(out_ref.dtype)


def ner_cnn_kernel_fused(ids_ref, table_ref, wc_ref, wfc_ref, bias_ref, out_ref,
                         *, seq_len):
    """Fused embedding gather (one-hot MXU matmul; exact for bf16 table rows)
    followed by conv + ReLU + FC.  Keeps the (R, E) activations out of HBM."""
    R = ids_ref.shape[0]
    Vp = table_ref.shape[0]
    ids = ids_ref[...]                                              # (R, 1) int32
    vocab_iota = jax.lax.broadcasted_iota(jnp.int32, (R, Vp), 1)
    onehot = jnp.where(ids == vocab_iota, 1.0, 0.0).astype(jnp.bfloat16)  # (R, Vp)
    # 1.0 * bf16 row accumulated in f32 is exact -> x equals the bf16 table rows.
    x = jnp.dot(onehot, table_ref[...],
                preferred_element_type=jnp.float32).astype(jnp.bfloat16)
    _conv_fc_body(x, wc_ref, wfc_ref, bias_ref, out_ref, seq_len)


def ner_cnn_kernel_pregathered(x_ref, wc_ref, wfc_ref, bias_ref, out_ref,
                               *, seq_len):
    """Fallback body when embeddings were gathered in the wrapper (large vocab)."""
    _conv_fc_body(x_ref[...], wc_ref, wfc_ref, bias_ref, out_ref, seq_len)


# ------------------------------- wrapper --------------------------------------

def _round_up(x, m):
    return (x + m - 1) // m * m


def _pick_seqs_per_block(B, S, target_rows=1024):
    """Whole sequences per grid step, ~target_rows rows/step so the MXU sees a
    deep M dimension and the ~0.35us/step pipeline overhead is amortized.
    TILE_R = bb*S must stay a multiple of S (conv edges never cross sequences)
    and a multiple of 8 (sublane-aligned blocks)."""
    bb = max(1, min(B, target_rows // max(S, 1)))
    while (bb * S) % 8 != 0:
        bb += 1
    return bb


def ner_cnn_forward(token_ids, emb_table, conv_w, conv_b, fc_w, fc_b):
    """token_ids: (B,S) int; emb_table: (V,E) f32; conv_w: (128,E,3);
    conv_b: (128,); fc_w: (num_classes,128); fc_b: (num_classes,)."""
    B, S = token_ids.shape
    V, E = emb_table.shape
    num_classes = fc_w.shape[0]
    assert conv_w.shape == (C_MID, E, 3)

    # Small padded class width (multiple of 8).  Masked stores, but ~8x less
    # f32 writeback than a 128-wide lane-dense slab, and the wrapper slice
    # re-reads far less.
    c_pad = _round_up(max(num_classes, 8), 8)

    # Fuse the three conv taps into one (E, 3*128) matmul weight (bf16).
    w_cat = jnp.concatenate(
        [conv_w[:, :, 0].T, conv_w[:, :, 1].T, conv_w[:, :, 2].T], axis=1
    ).astype(jnp.bfloat16)                                           # (E, 384)

    # FC weight padded to c_pad output columns (bf16).
    wfc = jnp.zeros((C_MID, c_pad), jnp.float32).at[:, :num_classes].set(fc_w.T)
    wfc = wfc.astype(jnp.bfloat16)

    # One (2, 128) f32 bias pack: row0 = conv bias, row1[:num_classes] = fc bias.
    bias = jnp.zeros((2, 128), jnp.float32)
    bias = bias.at[0, :].set(conv_b.astype(jnp.float32))
    bias = bias.at[1, :num_classes].set(fc_b.astype(jnp.float32))

    # Row tiling over flattened (B*S) rows; pad the batch tail with token id 0.
    bb = _pick_seqs_per_block(B, S)
    b_pad = _round_up(B, bb)
    tile_r = bb * S
    r_pad = b_pad * S
    grid = (b_pad // bb,)

    ids = token_ids.astype(jnp.int32).reshape(B * S, 1)
    if r_pad > B * S:
        ids = jnp.pad(ids, ((0, r_pad - B * S), (0, 0)))             # token id 0

    const_bytes = w_cat.size * 2 + wfc.size * 2 + bias.size * 4
    fuse_gather = V <= _FUSED_GATHER_MAX_VOCAB

    if fuse_gather:
        v_pad = _round_up(V, 128)
        table = jnp.zeros((v_pad, E), jnp.bfloat16).at[:V, :].set(
            emb_table.astype(jnp.bfloat16))
        kernel = functools.partial(ner_cnn_kernel_fused, seq_len=S)
        in_arrays = (ids, table, w_cat, wfc, bias)
        in_specs = [
            pl.BlockSpec((tile_r, 1), lambda g: (g, 0)),
            pl.BlockSpec((v_pad, E), lambda g: (0, 0)),
            pl.BlockSpec((E, 3 * C_MID), lambda g: (0, 0)),
            pl.BlockSpec((C_MID, c_pad), lambda g: (0, 0)),
            pl.BlockSpec((2, 128), lambda g: (0, 0)),
        ]
        flops = 2 * r_pad * (v_pad * E + E * 3 * C_MID + C_MID * c_pad)
        in_bytes = ids.size * 4 + table.size * 2 + const_bytes
        step_in_bytes = tile_r * 4 + table.size * 2 + const_bytes
        body_bytes = tile_r * (v_pad * 2 + E * 2 + 6 * C_MID * 4 + c_pad * 4)
    else:
        # TODO(synk): for large vocabs, fuse the gather in-kernel via a scalar-
        # prefetch-driven DMA row gather instead of this XLA gather round trip.
        emb = emb_table.astype(jnp.bfloat16)[token_ids.reshape(-1)]   # (B*S, E)
        if r_pad > B * S:
            emb = jnp.pad(emb, ((0, r_pad - B * S), (0, 0)))
        kernel = functools.partial(ner_cnn_kernel_pregathered, seq_len=S)
        in_arrays = (emb, w_cat, wfc, bias)
        in_specs = [
            pl.BlockSpec((tile_r, E), lambda g: (g, 0)),
            pl.BlockSpec((E, 3 * C_MID), lambda g: (0, 0)),
            pl.BlockSpec((C_MID, c_pad), lambda g: (0, 0)),
            pl.BlockSpec((2, 128), lambda g: (0, 0)),
        ]
        flops = 2 * r_pad * (E * 3 * C_MID + C_MID * c_pad)
        in_bytes = emb.size * 2 + const_bytes
        step_in_bytes = tile_r * E * 2 + const_bytes
        body_bytes = tile_r * (E * 2 + 6 * C_MID * 4 + c_pad * 4)

    out_bytes = r_pad * c_pad * 4
    cost = pl.CostEstimate(flops=int(flops), transcendentals=0,
                           bytes_accessed=int(in_bytes + out_bytes))

    # Explicit VMEM budget: v5e's scoped default is only 16 MiB and v7x has only
    # 64 MiB physical, so size from the (double-buffered) per-step working set
    # plus slack for f32 intermediates, capped well under v7x physical.
    step_bytes = 2 * (step_in_bytes + tile_r * c_pad * 4) + body_bytes
    vmem_limit = int(min(48 << 20, max(32 << 20, 2 * step_bytes)))

    # TODO(synk): constant inputs (table/w_cat/wfc/bias) could use
    # pipeline_mode=pl.Buffered(1) to drop their double-buffer reservation.
    out = pl.pallas_call(
        kernel,
        out_shape=jax.ShapeDtypeStruct((r_pad, c_pad), jnp.float32),
        grid=grid,
        in_specs=in_specs,
        out_specs=pl.BlockSpec((tile_r, c_pad), lambda g: (g, 0)),
        compiler_params=pltpu.CompilerParams(
            dimension_semantics=("parallel",),
            vmem_limit_bytes=vmem_limit),
        cost_estimate=cost,
    )(*in_arrays)

    return out[:B * S].reshape(B, S, c_pad)[:, :, :num_classes]


# ----------------------------- references -------------------------------------

def _reference_f32(token_ids, emb_table, conv_w, conv_b, fc_w, fc_b):
    # Pure-f32 reference of the PyTorch forward pass (eval mode: dropout = id).
    emb = emb_table[token_ids]                                       # (B, S, E)
    emb_pad = jnp.pad(emb, ((0, 0), (1, 1), (0, 0)))                 # conv padding=1
    B, S, E = emb.shape
    windows = jnp.stack([emb_pad[:, k:k + S, :] for k in range(3)], axis=-1)
    conv = jnp.einsum("bsek,oek->bso", windows, conv_w,
                      precision=jax.lax.Precision.HIGHEST) + conv_b
    h = jnp.maximum(conv, 0.0)
    return jnp.einsum("bsm,cm->bsc", h, fc_w,
                      precision=jax.lax.Precision.HIGHEST) + fc_b


def _reference_bf16(token_ids, emb_table, conv_w, conv_b, fc_w, fc_b):
    # Matches the kernel's quantization: bf16 table/weights/activations for the
    # matmuls, f32 accumulation, f32 bias/ReLU.
    q = lambda t: t.astype(jnp.bfloat16).astype(jnp.float32)
    emb = q(emb_table)[token_ids]
    emb_pad = jnp.pad(emb, ((0, 0), (1, 1), (0, 0)))
    B, S, E = emb.shape
    windows = jnp.stack([emb_pad[:, k:k + S, :] for k in range(3)], axis=-1)
    conv = jnp.einsum("bsek,oek->bso", windows, q(conv_w),
                      precision=jax.lax.Precision.HIGHEST) + conv_b
    h = q(jnp.maximum(conv, 0.0))
    return jnp.einsum("bsm,cm->bsc", h, q(fc_w),
                      precision=jax.lax.Precision.HIGHEST) + fc_b


if __name__ == "__main__":
    key = jax.random.PRNGKey(0)
    k_emb, k_tok, k_cw, k_cb, k_fw, k_fb = jax.random.split(key, 6)

    # Small, module-consistent shapes.
    vocab_size, embed_dim = 50, 32
    num_classes = 9
    B, S = 8, 16

    pretrained_embeddings = jax.random.normal(k_emb, (vocab_size, embed_dim), jnp.float32)
    token_ids = jax.random.randint(k_tok, (B, S), 0, vocab_size, jnp.int32)

    conv_w = 0.1 * jax.random.normal(k_cw, (C_MID, embed_dim, 3), jnp.float32)
    conv_b = 0.1 * jax.random.normal(k_cb, (C_MID,), jnp.float32)
    fc_w = 0.1 * jax.random.normal(k_fw, (num_classes, C_MID), jnp.float32)
    fc_b = 0.1 * jax.random.normal(k_fb, (num_classes,), jnp.float32)

    out = ner_cnn_forward(token_ids, pretrained_embeddings, conv_w, conv_b, fc_w, fc_b)
    out = jax.block_until_ready(out)
    assert out.shape == (B, S, num_classes)

    # Tight check vs. a reference using identical bf16 quantization.
    ref_q = _reference_bf16(token_ids, pretrained_embeddings, conv_w, conv_b, fc_w, fc_b)
    assert jnp.allclose(out, ref_q, atol=2e-3, rtol=2e-3), "mismatch vs bf16-consistent reference"

    # Sanity check vs. the pure-f32 PyTorch-equivalent math (bf16 tolerance).
    ref_f = _reference_f32(token_ids, pretrained_embeddings, conv_w, conv_b, fc_w, fc_b)
    assert jnp.allclose(out, ref_f, atol=5e-2, rtol=5e-2), "mismatch vs f32 reference"

    print("KERNEL_OK")
</pallas_src>

<mosaic_0001>
module attributes {stable_mosaic.version = 11 : i64} {
  func.func @ner_cnn_kernel_fused(%arg0: i32, %arg1: memref<128x1xi32, #tpu.memory_space<vmem>>, %arg2: memref<128x32xbf16, #tpu.memory_space<vmem>>, %arg3: memref<32x384xbf16, #tpu.memory_space<vmem>>, %arg4: memref<128x16xbf16, #tpu.memory_space<vmem>>, %arg5: memref<2x128xf32, #tpu.memory_space<vmem>>, %arg6: memref<128x16xf32, #tpu.memory_space<vmem>>) attributes {dimension_semantics = [#tpu.dimension_semantics<parallel>], iteration_bounds = array<i64: 1>, scalar_prefetch = 0 : i64, scratch_operands = 0 : i64, tpu.core_type = #tpu.core_type<tc>, window_params = [{transform_indices = @transform_0, window_bounds = array<i64: 128, 1>}, {pipeline_mode = #tpu.pipeline_mode<synchronous>, transform_indices = @transform_1, window_bounds = array<i64: 128, 32>}, {pipeline_mode = #tpu.pipeline_mode<synchronous>, transform_indices = @transform_2, window_bounds = array<i64: 32, 384>}, {pipeline_mode = #tpu.pipeline_mode<synchronous>, transform_indices = @transform_3, window_bounds = array<i64: 128, 16>}, {pipeline_mode = #tpu.pipeline_mode<synchronous>, transform_indices = @transform_4, window_bounds = array<i64: 2, 128>}, {transform_indices = @transform_5, window_bounds = array<i64: 128, 16>}]} {
    %c0 = arith.constant 0 : index
    %c0_0 = arith.constant 0 : index
    %0 = vector.load %arg1[%c0, %c0_0] : memref<128x1xi32, #tpu.memory_space<vmem>>, vector<128x1xi32>
    %1 = tpu.iota {dimensions = array<i32: 1>} : vector<128x128xi32>
    %2 = vector.broadcast %0 : vector<128x1xi32> to vector<128x128xi32>
    %3 = arith.cmpi eq, %2, %1 : vector<128x128xi32>
    %cst = arith.constant 1.000000e+00 : f32
    %cst_1 = arith.constant 0.000000e+00 : f32
    %4 = vector.broadcast %cst : f32 to vector<128x128xf32>
    %5 = vector.broadcast %cst_1 : f32 to vector<128x128xf32>
    %6 = arith.select %3, %4, %5 : vector<128x128xi1>, vector<128x128xf32>
    %7 = arith.truncf %6 : vector<128x128xf32> to vector<128x128xbf16>
    %c0_2 = arith.constant 0 : index
    %c0_3 = arith.constant 0 : index
    %8 = vector.load %arg2[%c0_2, %c0_3] : memref<128x32xbf16, #tpu.memory_space<vmem>>, vector<128x32xbf16>
    %cst_4 = arith.constant dense<0.000000e+00> : vector<128x32xf32>
    %9 = tpu.matmul %7, %8, %cst_4 {dimension_numbers = #tpu.dot_dimension_numbers<[1], [0], [0], [1], [0, 0, 1, 1], [], []>} : vector<128x128xbf16>, vector<128x32xbf16>, vector<128x32xf32> -> vector<128x32xf32>
    %10 = arith.truncf %9 : vector<128x32xf32> to vector<128x32xbf16>
    %c0_5 = arith.constant 0 : index
    %c0_6 = arith.constant 0 : index
    %11 = vector.load %arg3[%c0_5, %c0_6] : memref<32x384xbf16, #tpu.memory_space<vmem>>, vector<32x384xbf16>
    %cst_7 = arith.constant dense<0.000000e+00> : vector<128x384xf32>
    %12 = tpu.matmul %10, %11, %cst_7 {dimension_numbers = #tpu.dot_dimension_numbers<[1], [0], [0], [1], [0, 0, 1, 1], [], []>} : vector<128x32xbf16>, vector<32x384xbf16>, vector<128x384xf32> -> vector<128x384xf32>
    %13 = vector.extract_strided_slice %12 {offsets = [0, 0], sizes = [128, 128], strides = [1, 1]} : vector<128x384xf32> to vector<128x128xf32>
    %14 = vector.extract_strided_slice %12 {offsets = [0, 128], sizes = [128, 128], strides = [1, 1]} : vector<128x384xf32> to vector<128x128xf32>
    %15 = vector.extract_strided_slice %12 {offsets = [0, 256], sizes = [128, 128], strides = [1, 1]} : vector<128x384xf32> to vector<128x128xf32>
    %16 = tpu.iota {dimensions = array<i32: 0>} : vector<128x1xi32>
    %c16_i32 = arith.constant 16 : i32
    %c0_i32 = arith.constant 0 : i32
    %17 = arith.cmpi eq, %c16_i32, %c0_i32 : i32
    %c1_i32 = arith.constant 1 : i32
    %18 = arith.select %17, %c1_i32, %c16_i32 : i32
    %19 = vector.broadcast %18 : i32 to vector<128x1xi32>
    %20 = arith.remsi %16, %19 : vector<128x1xi32>
    %c0_i32_8 = arith.constant 0 : i32
    %21 = vector.broadcast %c0_i32_8 : i32 to vector<128x1xi32>
    %22 = arith.cmpi ne, %20, %21 : vector<128x1xi32>
    %c0_i32_9 = arith.constant 0 : i32
    %23 = vector.broadcast %c0_i32_9 : i32 to vector<128x1xi32>
    %24 = arith.cmpi slt, %20, %23 : vector<128x1xi32>
    %c0_i32_10 = arith.constant 0 : i32
    %25 = arith.cmpi slt, %18, %c0_i32_10 : i32
    %26 = vector.broadcast %25 : i1 to vector<128x1xi1>
    %27 = vector.broadcast %26 : vector<128x1xi1> to vector<128x1xi1>
    %28 = arith.xori %24, %27 : vector<128x1xi1>
    %29 = arith.andi %28, %22 : vector<128x1xi1>
    %30 = vector.broadcast %18 : i32 to vector<128x1xi32>
    %31 = arith.addi %20, %30 : vector<128x1xi32>
    %32 = arith.select %29, %31, %20 : vector<128x1xi1>, vector<128x1xi32>
    %c0_i32_11 = arith.constant 0 : i32
    %33 = vector.broadcast %c0_i32_11 : i32 to vector<128x1xi32>
    %34 = arith.cmpi eq, %32, %33 : vector<128x1xi32>
    %c15_i32 = arith.constant 15 : i32
    %35 = vector.broadcast %c15_i32 : i32 to vector<128x1xi32>
    %36 = arith.cmpi eq, %32, %35 : vector<128x1xi32>
    %c1_i32_12 = arith.constant 1 : i32
    %37 = tpu.dynamic_rotate %13 by %c1_i32_12 dim 0 : vector<128x128xf32>, i32 -> vector<128x128xf32>
    %cst_13 = arith.constant 0.000000e+00 : f32
    %38 = vector.shape_cast %34 : vector<128x1xi1> to vector<128x1xi1>
    %39 = vector.broadcast %38 : vector<128x1xi1> to vector<128x128xi1>
    %40 = vector.broadcast %cst_13 : f32 to vector<128x128xf32>
    %41 = arith.select %39, %40, %37 : vector<128x128xi1>, vector<128x128xf32>
    %c127_i32 = arith.constant 127 : i32
    %42 = tpu.dynamic_rotate %15 by %c127_i32 dim 0 : vector<128x128xf32>, i32 -> vector<128x128xf32>
    %cst_14 = arith.constant 0.000000e+00 : f32
    %43 = vector.shape_cast %36 : vector<128x1xi1> to vector<128x1xi1>
    %44 = vector.broadcast %43 : vector<128x1xi1> to vector<128x128xi1>
    %45 = vector.broadcast %cst_14 : f32 to vector<128x128xf32>
    %46 = arith.select %44, %45, %42 : vector<128x128xi1>, vector<128x128xf32>
    %47 = arith.addf %41, %14 : vector<128x128xf32>
    %48 = arith.addf %47, %46 : vector<128x128xf32>
    %c0_15 = arith.constant 0 : index
    %c0_16 = arith.constant 0 : index
    %49 = vector.load %arg5[%c0_15, %c0_16] : memref<2x128xf32, #tpu.memory_space<vmem>>, vector<1x128xf32>
    %50 = vector.broadcast %49 : vector<1x128xf32> to vector<128x128xf32>
    %51 = arith.addf %48, %50 : vector<128x128xf32>
    %cst_17 = arith.constant 0.000000e+00 : f32
    %52 = vector.broadcast %cst_17 : f32 to vector<128x128xf32>
    %53 = arith.maximumf %51, %52 : vector<128x128xf32>
    %54 = arith.truncf %53 : vector<128x128xf32> to vector<128x128xbf16>
    %c0_18 = arith.constant 0 : index
    %c0_19 = arith.constant 0 : index
    %55 = vector.load %arg4[%c0_18, %c0_19] : memref<128x16xbf16, #tpu.memory_space<vmem>>, vector<128x16xbf16>
    %cst_20 = arith.constant dense<0.000000e+00> : vector<128x16xf32>
    %56 = tpu.matmul %54, %55, %cst_20 {dimension_numbers = #tpu.dot_dimension_numbers<[1], [0], [0], [1], [0, 0, 1, 1], [], []>} : vector<128x128xbf16>, vector<128x16xbf16>, vector<128x16xf32> -> vector<128x16xf32>
    %c1 = arith.constant 1 : index
    %c0_21 = arith.constant 0 : index
    %57 = vector.load %arg5[%c1, %c0_21] : memref<2x128xf32, #tpu.memory_space<vmem>>, vector<1x16xf32>
    %58 = vector.broadcast %57 : vector<1x16xf32> to vector<128x16xf32>
    %59 = arith.addf %56, %58 : vector<128x16xf32>
    %c0_22 = arith.constant 0 : index
    %c0_23 = arith.constant 0 : index
    %60 = vector.load %arg6[%c0_22, %c0_23] : memref<128x16xf32, #tpu.memory_space<vmem>>, vector<128x16xf32>
    tpu.vector_store %arg6[%c0_22, %c0_23], %59 {strides = array<i32>} : memref<128x16xf32, #tpu.memory_space<vmem>>, vector<128x16xf32>,
    return
  }
  func.func @transform_0(%arg0: i32) -> (i32, i32) {
    %c0_i32 = arith.constant 0 : i32
    %c0_i32_0 = arith.constant 0 : i32
    return %arg0, %c0_i32 : i32, i32
  }
  func.func @transform_1(%arg0: i32) -> (i32, i32) {
    %c0_i32 = arith.constant 0 : i32
    %c0_i32_0 = arith.constant 0 : i32
    %c0_i32_1 = arith.constant 0 : i32
    return %c0_i32, %c0_i32_0 : i32, i32
  }
  func.func @transform_2(%arg0: i32) -> (i32, i32) {
    %c0_i32 = arith.constant 0 : i32
    %c0_i32_0 = arith.constant 0 : i32
    %c0_i32_1 = arith.constant 0 : i32
    return %c0_i32, %c0_i32_0 : i32, i32
  }
  func.func @transform_3(%arg0: i32) -> (i32, i32) {
    %c0_i32 = arith.constant 0 : i32
    %c0_i32_0 = arith.constant 0 : i32
    %c0_i32_1 = arith.constant 0 : i32
    return %c0_i32, %c0_i32_0 : i32, i32
  }
  func.func @transform_4(%arg0: i32) -> (i32, i32) {
    %c0_i32 = arith.constant 0 : i32
    %c0_i32_0 = arith.constant 0 : i32
    %c0_i32_1 = arith.constant 0 : i32
    return %c0_i32, %c0_i32_0 : i32, i32
  }
  func.func @transform_5(%arg0: i32) -> (i32, i32) {
    %c0_i32 = arith.constant 0 : i32
    %c0_i32_0 = arith.constant 0 : i32
    return %arg0, %c0_i32 : i32, i32
  }
}

</mosaic_0001>

<llo_original>
// kernel: tpu_custom_call.1
$region0: #{tpu_custom_call.1}
  #allocation0 [shape = 'u32[]', space=smem, size = 0x4, offset = 0x4, fixed_abs, tag = 'smem constant byte address 0x4 - core index']
  #allocation1 [shape = 'u32[72,128]{1,0:T(1,128)}', space=vmem, size = 0x9000, scoped, tag = 'internal scratch']
  %s0 = inlined_call_operand.vmem [shape: s32[128,1], index: 0, kind: input, shape index: {}]
  %s1 = inlined_call_operand.vmem [shape: bf16[128,32], index: 1, kind: input, shape index: {}]
  %s2 = inlined_call_operand.vmem [shape: bf16[32,384], index: 2, kind: input, shape index: {}]
  %s3 = inlined_call_operand.vmem [shape: bf16[128,16], index: 3, kind: input, shape index: {}]
  %s4 = inlined_call_operand.vmem [shape: f32[2,128], index: 4, kind: input, shape index: {}]
  %s5 = inlined_call_operand.vmem [shape: f32[128,16], index: 5, kind: output, shape index: {}]
  %s6 = sld [smem:[#allocation0]]
  $region30: #{tpu_custom_call.1} parent=0
    _
  %s8 = ssub.s32 1, %s6
  %s9 = scalar_select 0, %s8, %s6
  // Predicated region
  $region2: #{tpu_custom_call.1} parent=0 // pred_check
    _
  $region3: #{tpu_custom_call.1} parent=0 // pred_check_branch
    %11 = sbr.rel (0) target = $region5
  $region4: #{tpu_custom_call.1} parent=0 // pred_region
    _
  $region5: #{tpu_custom_call.1} parent=0 // pred_fallthru
    _
  // Predicated region
  $region6: #{tpu_custom_call.1} parent=0 // pred_check
    _
  $region7: #{tpu_custom_call.1} parent=0 // pred_check_branch
    %13 = sbr.rel (0) target = $region9
  $region8: #{tpu_custom_call.1} parent=0 // pred_region
    _
  $region9: #{tpu_custom_call.1} parent=0 // pred_fallthru
    _
  // Predicated region
  $region10: #{tpu_custom_call.1} parent=0 // pred_check
    _
  $region11: #{tpu_custom_call.1} parent=0 // pred_check_branch
    %15 = sbr.rel (0) target = $region13
  $region12: #{tpu_custom_call.1} parent=0 // pred_region
    _
  $region13: #{tpu_custom_call.1} parent=0 // pred_fallthru
    _
  // Predicated region
  $region14: #{tpu_custom_call.1} parent=0 // pred_check
    _
  $region15: #{tpu_custom_call.1} parent=0 // pred_check_branch
    %17 = sbr.rel (0) target = $region17
  $region16: #{tpu_custom_call.1} parent=0 // pred_region
    _
  $region17: #{tpu_custom_call.1} parent=0 // pred_fallthru
    _
  // Predicated region
  $region18: #{tpu_custom_call.1} parent=0 // pred_check
    _
  $region19: #{tpu_custom_call.1} parent=0 // pred_check_branch
    %19 = sbr.rel (0) target = $region21
  $region20: #{tpu_custom_call.1} parent=0 // pred_region
    _
  $region21: #{tpu_custom_call.1} parent=0 // pred_fallthru
    _
  %v21 = vld [vmem:[%s0] sm:$0xff]
  %v22 = vld [vmem:[%s0 + $0x8] sm:$0xff]
  %v23 = vld [vmem:[%s0 + $0x10] sm:$0xff]
  %v24 = vld [vmem:[%s0 + $0x18] sm:$0xff]
  %v25 = vld [vmem:[%s0 + $0x20] sm:$0xff]
  %v26 = vld [vmem:[%s0 + $0x28] sm:$0xff]
  %v27 = vld [vmem:[%s0 + $0x30] sm:$0xff]
  %v28 = vld [vmem:[%s0 + $0x38] sm:$0xff]
  %v29 = vld [vmem:[%s0 + $0x40] sm:$0xff]
  %v30 = vld [vmem:[%s0 + $0x48] sm:$0xff]
  %v31 = vld [vmem:[%s0 + $0x50] sm:$0xff]
  %v32 = vld [vmem:[%s0 + $0x58] sm:$0xff]
  %v33 = vld [vmem:[%s0 + $0x60] sm:$0xff]
  %v34 = vld [vmem:[%s0 + $0x68] sm:$0xff]
  %v35 = vld [vmem:[%s0 + $0x70] sm:$0xff]
  %v36 = vld [vmem:[%s0 + $0x78] sm:$0xff]
  %v37 = vlaneseq
  %v38 = vand.u32 %v37, 127
  %39 = vset.pattern.permute.xlu0 0
  %40 = vperm.xlu0 %39, %v21
  %v41 = vpop.permute.xlu0 %40
  %42 = vset.pattern.permute.xlu0 0
  %43 = vperm.xlu0 %42, %v22
  %v44 = vpop.permute.xlu0 %43
  %45 = vset.pattern.permute.xlu0 0
  %46 = vperm.xlu0 %45, %v23
  %v47 = vpop.permute.xlu0 %46
  %48 = vset.pattern.permute.xlu0 0
  %49 = vperm.xlu0 %48, %v24
  %v50 = vpop.permute.xlu0 %49
  %51 = vset.pattern.permute.xlu0 0
  %52 = vperm.xlu0 %51, %v25
  %v53 = vpop.permute.xlu0 %52
  %54 = vset.pattern.permute.xlu0 0
  %55 = vperm.xlu0 %54, %v26
  %v56 = vpop.permute.xlu0 %55
  %57 = vset.pattern.permute.xlu0 0
  %58 = vperm.xlu0 %57, %v27
  %v59 = vpop.permute.xlu0 %58
  %60 = vset.pattern.permute.xlu0 0
  %61 = vperm.xlu0 %60, %v28
  %v62 = vpop.permute.xlu0 %61
  %63 = vset.pattern.permute.xlu0 0
  %64 = vperm.xlu0 %63, %v29
  %v65 = vpop.permute.xlu0 %64
  %66 = vset.pattern.permute.xlu0 0
  %67 = vperm.xlu0 %66, %v30
  %v68 = vpop.permute.xlu0 %67
  %69 = vset.pattern.permute.xlu0 0
  %70 = vperm.xlu0 %69, %v31
  %v71 = vpop.permute.xlu0 %70
  %72 = vset.pattern.permute.xlu0 0
  %73 = vperm.xlu0 %72, %v32
  %v74 = vpop.permute.xlu0 %73
  %75 = vset.pattern.permute.xlu0 0
  %76 = vperm.xlu0 %75, %v33
  %v77 = vpop.permute.xlu0 %76
  %78 = vset.pattern.permute.xlu0 0
  %79 = vperm.xlu0 %78, %v34
  %v80 = vpop.permute.xlu0 %79
  %81 = vset.pattern.permute.xlu0 0
  %82 = vperm.xlu0 %81, %v35
  %v83 = vpop.permute.xlu0 %82
  %84 = vset.pattern.permute.xlu0 0
  %85 = vperm.xlu0 %84, %v36
  %v86 = vpop.permute.xlu0 %85
  %vm87 = vcmp.eq.s32.totalorder %v41, %v38
  %vm88 = vcmp.eq.s32.totalorder %v44, %v38
  %vm89 = vcmp.eq.s32.totalorder %v47, %v38
  %vm90 = vcmp.eq.s32.totalorder %v50, %v38
  %vm91 = vcmp.eq.s32.totalorder %v53, %v38
  %vm92 = vcmp.eq.s32.totalorder %v56, %v38
  %vm93 = vcmp.eq.s32.totalorder %v59, %v38
  %vm94 = vcmp.eq.s32.totalorder %v62, %v38
  %vm95 = vcmp.eq.s32.totalorder %v65, %v38
  %vm96 = vcmp.eq.s32.totalorder %v68, %v38
  %vm97 = vcmp.eq.s32.totalorder %v71, %v38
  %vm98 = vcmp.eq.s32.totalorder %v74, %v38
  %vm99 = vcmp.eq.s32.totalorder %v77, %v38
  %vm100 = vcmp.eq.s32.totalorder %v80, %v38
  %vm101 = vcmp.eq.s32.totalorder %v83, %v38
  %vm102 = vcmp.eq.s32.totalorder %v86, %v38
  %v103 = vsel %vm87, 1.0, 0.0
  %v104 = vsel %vm88, 1.0, 0.0
  %v105 = vsel %vm89, 1.0, 0.0
  %v106 = vsel %vm90, 1.0, 0.0
  %v107 = vsel %vm91, 1.0, 0.0
  %v108 = vsel %vm92, 1.0, 0.0
  %v109 = vsel %vm93, 1.0, 0.0
  %v110 = vsel %vm94, 1.0, 0.0
  %v111 = vsel %vm95, 1.0, 0.0
  %v112 = vsel %vm96, 1.0, 0.0
  %v113 = vsel %vm97, 1.0, 0.0
  %v114 = vsel %vm98, 1.0, 0.0
  %v115 = vsel %vm99, 1.0, 0.0
  %v116 = vsel %vm100, 1.0, 0.0
  %v117 = vsel %vm101, 1.0, 0.0
  %v118 = vsel %vm102, 1.0, 0.0
  %v119 = vpack.c.bf16 %v104, %v103
  %v120 = vpack.c.bf16 %v106, %v105
  %v121 = vpack.c.bf16 %v108, %v107
  %v122 = vpack.c.bf16 %v110, %v109
  %v123 = vpack.c.bf16 %v112, %v111
  %v124 = vpack.c.bf16 %v114, %v113
  %v125 = vpack.c.bf16 %v116, %v115
  %v126 = vpack.c.bf16 %v118, %v117
  %v127 = vld [vmem:[%s1] sm:$0xf]
  %v128 = vld [vmem:[%s1 + $0x4] sm:$0xf]
  %v129 = vld [vmem:[%s1 + $0x8] sm:$0xf]
  %v130 = vld [vmem:[%s1 + $0xc] sm:$0xf]
  %v131 = vld [vmem:[%s1 + $0x10] sm:$0xf]
  %v132 = vld [vmem:[%s1 + $0x14] sm:$0xf]
  %v133 = vld [vmem:[%s1 + $0x18] sm:$0xf]
  %v134 = vld [vmem:[%s1 + $0x1c] sm:$0xf]
  %v135 = vld [vmem:[%s1 + $0x20] sm:$0xf]
  %v136 = vld [vmem:[%s1 + $0x24] sm:$0xf]
  %v137 = vld [vmem:[%s1 + $0x28] sm:$0xf]
  %v138 = vld [vmem:[%s1 + $0x2c] sm:$0xf]
  %v139 = vld [vmem:[%s1 + $0x30] sm:$0xf]
  %v140 = vld [vmem:[%s1 + $0x34] sm:$0xf]
  %v141 = vld [vmem:[%s1 + $0x38] sm:$0xf]
  %v142 = vld [vmem:[%s1 + $0x3c] sm:$0xf]
  %v159 = vunpack.c.l.b16 %v127
  %v160 = vunpack.c.l.b16 %v128
  %v161 = vunpack.c.l.b16 %v129
  %v162 = vunpack.c.l.b16 %v130
  %v163 = vunpack.c.l.b16 %v131
  %v164 = vunpack.c.l.b16 %v132
  %v165 = vunpack.c.l.b16 %v133
  %v166 = vunpack.c.l.b16 %v134
  %v167 = vunpack.c.l.b16 %v135
  %v168 = vunpack.c.l.b16 %v136
  %v169 = vunpack.c.l.b16 %v137
  %v170 = vunpack.c.l.b16 %v138
  %v171 = vunpack.c.l.b16 %v139
  %v172 = vunpack.c.l.b16 %v140
  %v173 = vunpack.c.l.b16 %v141
  %v174 = vunpack.c.l.b16 %v142
  %v175 = vpack.c.b16 %v160, %v159
  %v176 = vpack.c.b16 %v162, %v161
  %v177 = vpack.c.b16 %v164, %v163
  %v178 = vpack.c.b16 %v166, %v165
  %v179 = vpack.c.b16 %v168, %v167
  %v180 = vpack.c.b16 %v170, %v169
  %v181 = vpack.c.b16 %v172, %v171
  %v182 = vpack.c.b16 %v174, %v173
  %191 = vmatpush.bf16.msra.mxu0 %v182
  %192 = vmatpush.bf16.msra.mxu0 %v181
  %193 = vmatpush.bf16.msra.mxu0 %v180
  %194 = vmatpush.bf16.msra.mxu0 %v179
  %195 = vmatpush.bf16.msra.mxu0 %v178
  %196 = vmatpush.bf16.msra.mxu0 %v177
  %197 = vmatpush.bf16.msra.mxu0 %v176
  %198 = vmatpush.bf16.msra.mxu0 %v175
  %199 = vmatmul.bf16.gmra.mxu0 %v119
  %v200 = vpop.f32.mrf.mxu0
  %v201 = vadd.f32 0.0, %v200
  %v202 = vpop.f32.mrf.mxu0
  %v203 = vadd.f32 0.0, %v202
  %204 = vmatmul.bf16.gmra.mxu0 %v120
  %v205 = vpop.f32.mrf.mxu0
  %v206 = vadd.f32 0.0, %v205
  %v207 = vpop.f32.mrf.mxu0
  %v208 = vadd.f32 0.0, %v207
  %209 = vmatmul.bf16.gmra.mxu0 %v121
  %v210 = vpop.f32.mrf.mxu0
  %v211 = vadd.f32 0.0, %v210
  %v212 = vpop.f32.mrf.mxu0
  %v213 = vadd.f32 0.0, %v212
  %214 = vmatmul.bf16.gmra.mxu0 %v122
  %v215 = vpop.f32.mrf.mxu0
  %v216 = vadd.f32 0.0, %v215
  %v217 = vpop.f32.mrf.mxu0
  %v218 = vadd.f32 0.0, %v217
  %219 = vmatmul.bf16.gmra.mxu0 %v123
  %v220 = vpop.f32.mrf.mxu0
  %v221 = vadd.f32 0.0, %v220
  %v222 = vpop.f32.mrf.mxu0
  %v223 = vadd.f32 0.0, %v222
  %224 = vmatmul.bf16.gmra.mxu0 %v124
  %v225 = vpop.f32.mrf.mxu0
  %v226 = vadd.f32 0.0, %v225
  %v227 = vpop.f32.mrf.mxu0
  %v228 = vadd.f32 0.0, %v227
  %229 = vmatmul.bf16.gmra.mxu0 %v125
  %v230 = vpop.f32.mrf.mxu0
  %v231 = vadd.f32 0.0, %v230
  %v232 = vpop.f32.mrf.mxu0
  %v233 = vadd.f32 0.0, %v232
  %234 = vmatmul.bf16.gmra.mxu0 %v126
  %v235 = vpop.f32.mrf.mxu0
  %v236 = vadd.f32 0.0, %v235
  %v237 = vpop.f32.mrf.mxu0
  %v238 = vadd.f32 0.0, %v237
  %239 = vdwg.mxu0
  %v240 = vpack.c.bf16 %v203, %v201
  %v241 = vpack.c.bf16 %v208, %v206
  %v242 = vpack.c.bf16 %v213, %v211
  %v243 = vpack.c.bf16 %v218, %v216
  %v244 = vpack.c.bf16 %v223, %v221
  %v245 = vpack.c.bf16 %v228, %v226
  %v246 = vpack.c.bf16 %v233, %v231
  %v247 = vpack.c.bf16 %v238, %v236
  %v248 = vld [vmem:[%s2] sm:$0xff]
  %v249 = vld [vmem:[%s2 + $0x8] sm:$0xf]
  %v250 = vld [vmem:[%s2 + $0xc] sm:$0xff]
  %v251 = vld [vmem:[%s2 + $0x14] sm:$0xf]
  %v252 = vld [vmem:[%s2 + $0x18] sm:$0xff]
  %v253 = vld [vmem:[%s2 + $0x20] sm:$0xf]
  %v254 = vld [vmem:[%s2 + $0x24] sm:$0xff]
  %v255 = vld [vmem:[%s2 + $0x2c] sm:$0xf]
  %v264 = vunpack.c.l.b16 %v248
  %v265 = vunpack.c.h.b16 %v248
  %v266 = vunpack.c.l.b16 %v249
  %v267 = vunpack.c.l.b16 %v250
  %v268 = vunpack.c.h.b16 %v250
  %v269 = vunpack.c.l.b16 %v251
  %v270 = vunpack.c.l.b16 %v252
  %v271 = vunpack.c.h.b16 %v252
  %v272 = vunpack.c.l.b16 %v253
  %v273 = vunpack.c.l.b16 %v254
  %v274 = vunpack.c.h.b16 %v254
  %v275 = vunpack.c.l.b16 %v255
  %v276 = vpack.c.b16 %v267, %v264
  %v277 = vpack.c.b16 %v268, %v265
  %v278 = vpack.c.b16 %v269, %v266
  %v279 = vpack.c.b16 %v273, %v270
  %v280 = vpack.c.b16 %v274, %v271
  %v281 = vpack.c.b16 %v275, %v272
  %vm288 = vcmask 261120
  %v290 = vsel %vm288, %v240, 0
  %v293 = vsel %vm288, %v241, 0
  %v296 = vsel %vm288, %v242, 0
  %v299 = vsel %vm288, %v243, 0
  %v302 = vsel %vm288, %v244, 0
  %v305 = vsel %vm288, %v245, 0
  %v308 = vsel %vm288, %v246, 0
  %v311 = vsel %vm288, %v247, 0
  %313 = vmatpush.bf16.msra.mxu0 0
  %314 = vmatpush.bf16.msra.mxu0 0
  %315 = vmatpush.bf16.msra.mxu0 0
  %316 = vmatpush.bf16.msra.mxu0 0
  %317 = vmatpush.bf16.msra.mxu0 0
  %318 = vmatpush.bf16.msra.mxu0 0
  %319 = vmatpush.bf16.msra.mxu0 %v279
  %320 = vmatpush.bf16.msra.mxu0 %v276
  %321 = vmatmul.bf16.gmra.mxu0 %v290
  %v322 = vpop.f32.mrf.mxu0
  %v323 = vadd.f32 0.0, %v322
  %v324 = vpop.f32.mrf.mxu0
  %v325 = vadd.f32 0.0, %v324
  %326 = vmatmul.bf16.gmra.mxu0 %v293
  %v327 = vpop.f32.mrf.mxu0
  %v328 = vadd.f32 0.0, %v327
  %v329 = vpop.f32.mrf.mxu0
  %v330 = vadd.f32 0.0, %v329
  %331 = vmatmul.bf16.gmra.mxu0 %v296
  %v332 = vpop.f32.mrf.mxu0
  %v333 = vadd.f32 0.0, %v332
  %v334 = vpop.f32.mrf.mxu0
  %v335 = vadd.f32 0.0, %v334
  %336 = vmatmul.bf16.gmra.mxu0 %v299
  %v337 = vpop.f32.mrf.mxu0
  %v338 = vadd.f32 0.0, %v337
  %v339 = vpop.f32.mrf.mxu0
  %v340 = vadd.f32 0.0, %v339
  %341 = vmatmul.bf16.gmra.mxu0 %v302
  %v342 = vpop.f32.mrf.mxu0
  %v343 = vadd.f32 0.0, %v342
  %v344 = vpop.f32.mrf.mxu0
  %v345 = vadd.f32 0.0, %v344
  %346 = vmatmul.bf16.gmra.mxu0 %v305
  %v347 = vpop.f32.mrf.mxu0
  %v348 = vadd.f32 0.0, %v347
  %v349 = vpop.f32.mrf.mxu0
  %v350 = vadd.f32 0.0, %v349
  %351 = vmatmul.bf16.gmra.mxu0 %v308
  %v352 = vpop.f32.mrf.mxu0
  %v353 = vadd.f32 0.0, %v352
  %v354 = vpop.f32.mrf.mxu0
  %v355 = vadd.f32 0.0, %v354
  %356 = vmatmul.bf16.gmra.mxu0 %v311
  %v357 = vpop.f32.mrf.mxu0
  %v358 = vadd.f32 0.0, %v357
  %v359 = vpop.f32.mrf.mxu0
  %v360 = vadd.f32 0.0, %v359
  %361 = vdwg.mxu0
  %362 = vmatpush.bf16.msra.mxu0 0
  %363 = vmatpush.bf16.msra.mxu0 0
  %364 = vmatpush.bf16.msra.mxu0 0
  %365 = vmatpush.bf16.msra.mxu0 0
  %366 = vmatpush.bf16.msra.mxu0 0
  %367 = vmatpush.bf16.msra.mxu0 0
  %368 = vmatpush.bf16.msra.mxu0 %v280
  %369 = vmatpush.bf16.msra.mxu0 %v277
  %370 = vmatmul.bf16.gmra.mxu0 %v290
  %v371 = vpop.f32.mrf.mxu0
  %v372 = vadd.f32 0.0, %v371
  %v373 = vpop.f32.mrf.mxu0
  %v374 = vadd.f32 0.0, %v373
  %375 = vmatmul.bf16.gmra.mxu0 %v293
  %v376 = vpop.f32.mrf.mxu0
  %v377 = vadd.f32 0.0, %v376
  %v378 = vpop.f32.mrf.mxu0
  %v379 = vadd.f32 0.0, %v378
  %380 = vmatmul.bf16.gmra.mxu0 %v296
  %v381 = vpop.f32.mrf.mxu0
  %v382 = vadd.f32 0.0, %v381
  %v383 = vpop.f32.mrf.mxu0
  %v384 = vadd.f32 0.0, %v383
  %385 = vmatmul.bf16.gmra.mxu0 %v299
  %v386 = vpop.f32.mrf.mxu0
  %v387 = vadd.f32 0.0, %v386
  %v388 = vpop.f32.mrf.mxu0
  %v389 = vadd.f32 0.0, %v388
  %390 = vmatmul.bf16.gmra.mxu0 %v302
  %v391 = vpop.f32.mrf.mxu0
  %v392 = vadd.f32 0.0, %v391
  %v393 = vpop.f32.mrf.mxu0
  %v394 = vadd.f32 0.0, %v393
  %395 = vmatmul.bf16.gmra.mxu0 %v305
  %v396 = vpop.f32.mrf.mxu0
  %v397 = vadd.f32 0.0, %v396
  %v398 = vpop.f32.mrf.mxu0
  %v399 = vadd.f32 0.0, %v398
  %400 = vmatmul.bf16.gmra.mxu0 %v308
  %v401 = vpop.f32.mrf.mxu0
  %v402 = vadd.f32 0.0, %v401
  %v403 = vpop.f32.mrf.mxu0
  %v404 = vadd.f32 0.0, %v403
  %405 = vmatmul.bf16.gmra.mxu0 %v311
  %v406 = vpop.f32.mrf.mxu0
  %v407 = vadd.f32 0.0, %v406
  %v408 = vpop.f32.mrf.mxu0
  %v409 = vadd.f32 0.0, %v408
  %410 = vdwg.mxu0
  %411 = vmatpush.bf16.msra.mxu0 0
  %412 = vmatpush.bf16.msra.mxu0 0
  %413 = vmatpush.bf16.msra.mxu0 0
  %414 = vmatpush.bf16.msra.mxu0 0
  %415 = vmatpush.bf16.msra.mxu0 0
  %416 = vmatpush.bf16.msra.mxu0 0
  %417 = vmatpush.bf16.msra.mxu0 %v281
  %418 = vmatpush.bf16.msra.mxu0 %v278
  %419 = vmatmul.bf16.gmra.mxu0 %v290
  %v420 = vpop.f32.mrf.mxu0
  %v421 = vadd.f32 0.0, %v420
  %v422 = vpop.f32.mrf.mxu0
  %v423 = vadd.f32 0.0, %v422
  %424 = vmatmul.bf16.gmra.mxu0 %v293
  %v425 = vpop.f32.mrf.mxu0
  %v426 = vadd.f32 0.0, %v425
  %v427 = vpop.f32.mrf.mxu0
  %v428 = vadd.f32 0.0, %v427
  %429 = vmatmul.bf16.gmra.mxu0 %v296
  %v430 = vpop.f32.mrf.mxu0
  %v431 = vadd.f32 0.0, %v430
  %v432 = vpop.f32.mrf.mxu0
  %v433 = vadd.f32 0.0, %v432
  %434 = vmatmul.bf16.gmra.mxu0 %v299
  %v435 = vpop.f32.mrf.mxu0
  %v436 = vadd.f32 0.0, %v435
  %v437 = vpop.f32.mrf.mxu0
  %v438 = vadd.f32 0.0, %v437
  %439 = vmatmul.bf16.gmra.mxu0 %v302
  %v440 = vpop.f32.mrf.mxu0
  %v441 = vadd.f32 0.0, %v440
  %v442 = vpop.f32.mrf.mxu0
  %v443 = vadd.f32 0.0, %v442
  %444 = vmatmul.bf16.gmra.mxu0 %v305
  %v445 = vpop.f32.mrf.mxu0
  %v446 = vadd.f32 0.0, %v445
  %v447 = vpop.f32.mrf.mxu0
  %v448 = vadd.f32 0.0, %v447
  %449 = vmatmul.bf16.gmra.mxu0 %v308
  %v450 = vpop.f32.mrf.mxu0
  %v451 = vadd.f32 0.0, %v450
  %v452 = vpop.f32.mrf.mxu0
  %v453 = vadd.f32 0.0, %v452
  %454 = vmatmul.bf16.gmra.mxu0 %v311
  %v455 = vpop.f32.mrf.mxu0
  %v456 = vadd.f32 0.0, %v455
  %v457 = vpop.f32.mrf.mxu0
  %v458 = vadd.f32 0.0, %v457
  %459 = vdwg.mxu0
  %v460 = vlaneseq
  %v461 = vshrl.u32 %v460, 7
  %v462 = vadd.s32 %v461, 8
  %v463 = vadd.s32 %v461, 16
  %v464 = vadd.s32 %v461, 24
  %v465 = vadd.s32 %v461, 32
  %v466 = vadd.s32 %v461, 40
  %v467 = vadd.s32 %v461, 48
  %v468 = vadd.s32 %v461, 56
  %v469 = vadd.s32 %v461, 64
  %v470 = vadd.s32 %v461, 72
  %v471 = vadd.s32 %v461, 80
  %v472 = vadd.s32 %v461, 88
  %v473 = vadd.s32 %v461, 96
  %v474 = vadd.s32 %v461, 104
  %v475 = vadd.s32 %v461, 112
  %v476 = vadd.s32 %v461, 120
  %vm477 = vcmp.lt.s32.totalorder %v461, 0
  %v478 = vsub.s32 0, %v461
  %v479 = vsel %vm477, %v478, %v461
  %v480 = vshrl.u32 %v479, 4
  %v481 = vand.u32 %v479, 15
  %v482 = vsub.s32 0, %v481
  %v483 = vsel %vm477, %v482, %v481
  %vm484 = vcmp.lt.s32.totalorder %v462, 0
  %v485 = vsub.s32 0, %v462
  %v486 = vsel %vm484, %v485, %v462
  %v487 = vshrl.u32 %v486, 4
  %v488 = vand.u32 %v486, 15
  %v489 = vsub.s32 0, %v488
  %v490 = vsel %vm484, %v489, %v488
  %vm491 = vcmp.lt.s32.totalorder %v463, 0
  %v492 = vsub.s32 0, %v463
  %v493 = vsel %vm491, %v492, %v463
  %v494 = vshrl.u32 %v493, 4
  %v495 = vand.u32 %v493, 15
  %v496 = vsub.s32 0, %v495
  %v497 = vsel %vm491, %v496, %v495
  %vm498 = vcmp.lt.s32.totalorder %v464, 0
  %v499 = vsub.s32 0, %v464
  %v500 = vsel %vm498, %v499, %v464
  %v501 = vshrl.u32 %v500, 4
  %v502 = vand.u32 %v500, 15
  %v503 = vsub.s32 0, %v502
  %v504 = vsel %vm498, %v503, %v502
  %vm505 = vcmp.lt.s32.totalorder %v465, 0
  %v506 = vsub.s32 0, %v465
  %v507 = vsel %vm505, %v506, %v465
  %v508 = vshrl.u32 %v507, 4
  %v509 = vand.u32 %v507, 15
  %v510 = vsub.s32 0, %v509
  %v511 = vsel %vm505, %v510, %v509
  %vm512 = vcmp.lt.s32.totalorder %v466, 0
  %v513 = vsub.s32 0, %v466
  %v514 = vsel %vm512, %v513, %v466
  %v515 = vshrl.u32 %v514, 4
  %v516 = vand.u32 %v514, 15
  %v517 = vsub.s32 0, %v516
  %v518 = vsel %vm512, %v517, %v516
  %vm519 = vcmp.lt.s32.totalorder %v467, 0
  %v520 = vsub.s32 0, %v467
  %v521 = vsel %vm519, %v520, %v467
  %v522 = vshrl.u32 %v521, 4
  %v523 = vand.u32 %v521, 15
  %v524 = vsub.s32 0, %v523
  %v525 = vsel %vm519, %v524, %v523
  %vm526 = vcmp.lt.s32.totalorder %v468, 0
  %v527 = vsub.s32 0, %v468
  %v528 = vsel %vm526, %v527, %v468
  %v529 = vshrl.u32 %v528, 4
  %v530 = vand.u32 %v528, 15
  %v531 = vsub.s32 0, %v530
  %v532 = vsel %vm526, %v531, %v530
  %vm533 = vcmp.lt.s32.totalorder %v469, 0
  %v534 = vsub.s32 0, %v469
  %v535 = vsel %vm533, %v534, %v469
  %v536 = vshrl.u32 %v535, 4
  %v537 = vand.u32 %v535, 15
  %v538 = vsub.s32 0, %v537
  %v539 = vsel %vm533, %v538, %v537
  %vm540 = vcmp.lt.s32.totalorder %v470, 0
  %v541 = vsub.s32 0, %v470
  %v542 = vsel %vm540, %v541, %v470
  %v543 = vshrl.u32 %v542, 4
  %v544 = vand.u32 %v542, 15
  %v545 = vsub.s32 0, %v544
  %v546 = vsel %vm540, %v545, %v544
  %vm547 = vcmp.lt.s32.totalorder %v471, 0
  %v548 = vsub.s32 0, %v471
  %v549 = vsel %vm547, %v548, %v471
  %v550 = vshrl.u32 %v549, 4
  %v551 = vand.u32 %v549, 15
  %v552 = vsub.s32 0, %v551
  %v553 = vsel %vm547, %v552, %v551
  %vm554 = vcmp.lt.s32.totalorder %v472, 0
  %v555 = vsub.s32 0, %v472
  %v556 = vsel %vm554, %v555, %v472
  %v557 = vshrl.u32 %v556, 4
  %v558 = vand.u32 %v556, 15
  %v559 = vsub.s32 0, %v558
  %v560 = vsel %vm554, %v559, %v558
  %vm561 = vcmp.lt.s32.totalorder %v473, 0
  %v562 = vsub.s32 0, %v473
  %v563 = vsel %vm561, %v562, %v473
  %v564 = vshrl.u32 %v563, 4
  %v565 = vand.u32 %v563, 15
  %v566 = vsub.s32 0, %v565
  %v567 = vsel %vm561, %v566, %v565
  %vm568 = vcmp.lt.s32.totalorder %v474, 0
  %v569 = vsub.s32 0, %v474
  %v570 = vsel %vm568, %v569, %v474
  %v571 = vshrl.u32 %v570, 4
  %v572 = vand.u32 %v570, 15
  %v573 = vsub.s32 0, %v572
  %v574 = vsel %vm568, %v573, %v572
  %vm575 = vcmp.lt.s32.totalorder %v475, 0
  %v576 = vsub.s32 0, %v475
  %v577 = vsel %vm575, %v576, %v475
  %v578 = vshrl.u32 %v577, 4
  %v579 = vand.u32 %v577, 15
  %v580 = vsub.s32 0, %v579
  %v581 = vsel %vm575, %v580, %v579
  %vm582 = vcmp.lt.s32.totalorder %v476, 0
  %v583 = vsub.s32 0, %v476
  %v584 = vsel %vm582, %v583, %v476
  %v585 = vshrl.u32 %v584, 4
  %v586 = vand.u32 %v584, 15
  %v587 = vsub.s32 0, %v586
  %v588 = vsel %vm582, %v587, %v586
  %vm589 = vcmp.ne.s32.totalorder %v483, 0
  %vm590 = vcmp.ne.s32.totalorder %v490, 0
  %vm591 = vcmp.ne.s32.totalorder %v497, 0
  %vm592 = vcmp.ne.s32.totalorder %v504, 0
  %vm593 = vcmp.ne.s32.totalorder %v511, 0
  %vm594 = vcmp.ne.s32.totalorder %v518, 0
  %vm595 = vcmp.ne.s32.totalorder %v525, 0
  %vm596 = vcmp.ne.s32.totalorder %v532, 0
  %vm597 = vcmp.ne.s32.totalorder %v539, 0
  %vm598 = vcmp.ne.s32.totalorder %v546, 0
  %vm599 = vcmp.ne.s32.totalorder %v553, 0
  %vm600 = vcmp.ne.s32.totalorder %v560, 0
  %vm601 = vcmp.ne.s32.totalorder %v567, 0
  %vm602 = vcmp.ne.s32.totalorder %v574, 0
  %vm603 = vcmp.ne.s32.totalorder %v581, 0
  %vm604 = vcmp.ne.s32.totalorder %v588, 0
  %vm605 = vcmp.lt.s32.totalorder %v483, 0
  %vm606 = vcmp.lt.s32.totalorder %v490, 0
  %vm607 = vcmp.lt.s32.totalorder %v497, 0
  %vm608 = vcmp.lt.s32.totalorder %v504, 0
  %vm609 = vcmp.lt.s32.totalorder %v511, 0
  %vm610 = vcmp.lt.s32.totalorder %v518, 0
  %vm611 = vcmp.lt.s32.totalorder %v525, 0
  %vm612 = vcmp.lt.s32.totalorder %v532, 0
  %vm613 = vcmp.lt.s32.totalorder %v539, 0
  %vm614 = vcmp.lt.s32.totalorder %v546, 0
  %vm615 = vcmp.lt.s32.totalorder %v553, 0
  %vm616 = vcmp.lt.s32.totalorder %v560, 0
  %vm617 = vcmp.lt.s32.totalorder %v567, 0
  %vm618 = vcmp.lt.s32.totalorder %v574, 0
  %vm619 = vcmp.lt.s32.totalorder %v581, 0
  %vm620 = vcmp.lt.s32.totalorder %v588, 0
  %vm621 = vmand %vm605, %vm589
  %vm622 = vmand %vm606, %vm590
  %vm623 = vmand %vm607, %vm591
  %vm624 = vmand %vm608, %vm592
  %vm625 = vmand %vm609, %vm593
  %vm626 = vmand %vm610, %vm594
  %vm627 = vmand %vm611, %vm595
  %vm628 = vmand %vm612, %vm596
  %vm629 = vmand %vm613, %vm597
  %vm630 = vmand %vm614, %vm598
  %vm631 = vmand %vm615, %vm599
  %vm632 = vmand %vm616, %vm600
  %vm633 = vmand %vm617, %vm601
  %vm634 = vmand %vm618, %vm602
  %vm635 = vmand %vm619, %vm603
  %vm636 = vmand %vm620, %vm604
  %v637 = vadd.s32 %v483, 16
  %v638 = vadd.s32 %v490, 16
  %v639 = vadd.s32 %v497, 16
  %v640 = vadd.s32 %v504, 16
  %v641 = vadd.s32 %v511, 16
  %v642 = vadd.s32 %v518, 16
  %v643 = vadd.s32 %v525, 16
  %v644 = vadd.s32 %v532, 16
  %v645 = vadd.s32 %v539, 16
  %v646 = vadd.s32 %v546, 16
  %v647 = vadd.s32 %v553, 16
  %v648 = vadd.s32 %v560, 16
  %v649 = vadd.s32 %v567, 16
  %v650 = vadd.s32 %v574, 16
  %v651 = vadd.s32 %v581, 16
  %v652 = vadd.s32 %v588, 16
  %v653 = vsel %vm621, %v637, %v483
  %v654 = vsel %vm622, %v638, %v490
  %v655 = vsel %vm623, %v639, %v497
  %v656 = vsel %vm624, %v640, %v504
  %v657 = vsel %vm625, %v641, %v511
  %v658 = vsel %vm626, %v642, %v518
  %v659 = vsel %vm627, %v643, %v525
  %v660 = vsel %vm628, %v644, %v532
  %v661 = vsel %vm629, %v645, %v539
  %v662 = vsel %vm630, %v646, %v546
  %v663 = vsel %vm631, %v647, %v553
  %v664 = vsel %vm632, %v648, %v560
  %v665 = vsel %vm633, %v649, %v567
  %v666 = vsel %vm634, %v650, %v574
  %v667 = vsel %vm635, %v651, %v581
  %v668 = vsel %vm636, %v652, %v588
  %vm669 = vcmp.eq.s32.totalorder %v653, 0
  %vm670 = vcmp.eq.s32.totalorder %v654, 0
  %vm671 = vcmp.eq.s32.totalorder %v655, 0
  %vm672 = vcmp.eq.s32.totalorder %v656, 0
  %vm673 = vcmp.eq.s32.totalorder %v657, 0
  %vm674 = vcmp.eq.s32.totalorder %v658, 0
  %vm675 = vcmp.eq.s32.totalorder %v659, 0
  %vm676 = vcmp.eq.s32.totalorder %v660, 0
  %vm677 = vcmp.eq.s32.totalorder %v661, 0
  %vm678 = vcmp.eq.s32.totalorder %v662, 0
  %vm679 = vcmp.eq.s32.totalorder %v663, 0
  %vm680 = vcmp.eq.s32.totalorder %v664, 0
  %vm681 = vcmp.eq.s32.totalorder %v665, 0
  %vm682 = vcmp.eq.s32.totalorder %v666, 0
  %vm683 = vcmp.eq.s32.totalorder %v667, 0
  %vm684 = vcmp.eq.s32.totalorder %v668, 0
  %vm685 = vcmp.eq.s32.totalorder %v653, 15
  %vm686 = vcmp.eq.s32.totalorder %v654, 15
  %vm687 = vcmp.eq.s32.totalorder %v655, 15
  %vm688 = vcmp.eq.s32.totalorder %v656, 15
  %vm689 = vcmp.eq.s32.totalorder %v657, 15
  %vm690 = vcmp.eq.s32.totalorder %v658, 15
  %vm691 = vcmp.eq.s32.totalorder %v659, 15
  %vm692 = vcmp.eq.s32.totalorder %v660, 15
  %vm693 = vcmp.eq.s32.totalorder %v661, 15
  %vm694 = vcmp.eq.s32.totalorder %v662, 15
  %vm695 = vcmp.eq.s32.totalorder %v663, 15
  %vm696 = vcmp.eq.s32.totalorder %v664, 15
  %vm697 = vcmp.eq.s32.totalorder %v665, 15
  %vm698 = vcmp.eq.s32.totalorder %v666, 15
  %vm699 = vcmp.eq.s32.totalorder %v667, 15
  %vm700 = vcmp.eq.s32.totalorder %v668, 15
  %v701 = vrot.slane %v323, 7
  %v702 = vrot.slane %v325, 7
  %v703 = vrot.slane %v328, 7
  %v704 = vrot.slane %v330, 7
  %v705 = vrot.slane %v333, 7
  %v706 = vrot.slane %v335, 7
  %v707 = vrot.slane %v338, 7
  %v708 = vrot.slane %v340, 7
  %v709 = vrot.slane %v343, 7
  %v710 = vrot.slane %v345, 7
  %v711 = vrot.slane %v348, 7
  %v712 = vrot.slane %v350, 7
  %v713 = vrot.slane %v353, 7
  %v714 = vrot.slane %v355, 7
  %v715 = vrot.slane %v358, 7
  %v716 = vrot.slane %v360, 7
  %vm717 = vcmp.lt.s32.totalorder %v461, 1
  %v718 = vsel %vm717, %v715, %v716
  %v719 = vsel %vm717, %v714, %v715
  %v720 = vsel %vm717, %v713, %v714
  %v721 = vsel %vm717, %v712, %v713
  %v722 = vsel %vm717, %v711, %v712
  %v723 = vsel %vm717, %v710, %v711
  %v724 = vsel %vm717, %v709, %v710
  %v725 = vsel %vm717, %v708, %v709
  %v726 = vsel %vm717, %v707, %v708
  %v727 = vsel %vm717, %v706, %v707
  %v728 = vsel %vm717, %v705, %v706
  %v729 = vsel %vm717, %v704, %v705
  %v730 = vsel %vm717, %v703, %v704
  %v731 = vsel %vm717, %v702, %v703
  %v732 = vsel %vm717, %v701, %v702
  %v733 = vsel %vm717, %v716, %v701
  %v734 = vsel %vm669, 1, 0
  %v735 = vsel %vm670, 1, 0
  %v736 = vsel %vm671, 1, 0
  %v737 = vsel %vm672, 1, 0
  %v738 = vsel %vm673, 1, 0
  %v739 = vsel %vm674, 1, 0
  %v740 = vsel %vm675, 1, 0
  %v741 = vsel %vm676, 1, 0
  %v742 = vsel %vm677, 1, 0
  %v743 = vsel %vm678, 1, 0
  %v744 = vsel %vm679, 1, 0
  %v745 = vsel %vm680, 1, 0
  %v746 = vsel %vm681, 1, 0
  %v747 = vsel %vm682, 1, 0
  %v748 = vsel %vm683, 1, 0
  %v749 = vsel %vm684, 1, 0
  %vm750 = vcmp.eq.s32.totalorder %v734, 1
  %vm751 = vcmp.eq.s32.totalorder %v735, 1
  %vm752 = vcmp.eq.s32.totalorder %v736, 1
  %vm753 = vcmp.eq.s32.totalorder %v737, 1
  %vm754 = vcmp.eq.s32.totalorder %v738, 1
  %vm755 = vcmp.eq.s32.totalorder %v739, 1
  %vm756 = vcmp.eq.s32.totalorder %v740, 1
  %vm757 = vcmp.eq.s32.totalorder %v741, 1
  %vm758 = vcmp.eq.s32.totalorder %v742, 1
  %vm759 = vcmp.eq.s32.totalorder %v743, 1
  %vm760 = vcmp.eq.s32.totalorder %v744, 1
  %vm761 = vcmp.eq.s32.totalorder %v745, 1
  %vm762 = vcmp.eq.s32.totalorder %v746, 1
  %vm763 = vcmp.eq.s32.totalorder %v747, 1
  %vm764 = vcmp.eq.s32.totalorder %v748, 1
  %vm765 = vcmp.eq.s32.totalorder %v749, 1
  %v766 = vsel %vm750, 0.0, %v733
  %v767 = vsel %vm751, 0.0, %v732
  %v768 = vsel %vm752, 0.0, %v731
  %v769 = vsel %vm753, 0.0, %v730
  %v770 = vsel %vm754, 0.0, %v729
  %v771 = vsel %vm755, 0.0, %v728
  %v772 = vsel %vm756, 0.0, %v727
  %v773 = vsel %vm757, 0.0, %v726
  %v774 = vsel %vm758, 0.0, %v725
  %v775 = vsel %vm759, 0.0, %v724
  %v776 = vsel %vm760, 0.0, %v723
  %v777 = vsel %vm761, 0.0, %v722
  %v778 = vsel %vm762, 0.0, %v721
  %v779 = vsel %vm763, 0.0, %v720
  %v780 = vsel %vm764, 0.0, %v719
  %v781 = vsel %vm765, 0.0, %v718
  %v782 = vrot.slane %v421, 1
  %v783 = vrot.slane %v423, 1
  %v784 = vrot.slane %v426, 1
  %v785 = vrot.slane %v428, 1
  %v786 = vrot.slane %v431, 1
  %v787 = vrot.slane %v433, 1
  %v788 = vrot.slane %v436, 1
  %v789 = vrot.slane %v438, 1
  %v790 = vrot.slane %v441, 1
  %v791 = vrot.slane %v443, 1
  %v792 = vrot.slane %v446, 1
  %v793 = vrot.slane %v448, 1
  %v794 = vrot.slane %v451, 1
  %v795 = vrot.slane %v453, 1
  %v796 = vrot.slane %v456, 1
  %v797 = vrot.slane %v458, 1
  %vm798 = vcmp.lt.s32.totalorder %v461, 7
  %v799 = vsel %vm798, %v796, %v797
  %v800 = vsel %vm798, %v795, %v796
  %v801 = vsel %vm798, %v794, %v795
  %v802 = vsel %vm798, %v793, %v794
  %v803 = vsel %vm798, %v792, %v793
  %v804 = vsel %vm798, %v791, %v792
  %v805 = vsel %vm798, %v790, %v791
  %v806 = vsel %vm798, %v789, %v790
  %v807 = vsel %vm798, %v788, %v789
  %v808 = vsel %vm798, %v787, %v788
  %v809 = vsel %vm798, %v786, %v787
  %v810 = vsel %vm798, %v785, %v786
  %v811 = vsel %vm798, %v784, %v785
  %v812 = vsel %vm798, %v783, %v784
  %v813 = vsel %vm798, %v782, %v783
  %v814 = vsel %vm798, %v797, %v782
  %v815 = vsel %vm685, 1, 0
  %v816 = vsel %vm686, 1, 0
  %v817 = vsel %vm687, 1, 0
  %v818 = vsel %vm688, 1, 0
  %v819 = vsel %vm689, 1, 0
  %v820 = vsel %vm690, 1, 0
  %v821 = vsel %vm691, 1, 0
  %v822 = vsel %vm692, 1, 0
  %v823 = vsel %vm693, 1, 0
  %v824 = vsel %vm694, 1, 0
  %v825 = vsel %vm695, 1, 0
  %v826 = vsel %vm696, 1, 0
  %v827 = vsel %vm697, 1, 0
  %v828 = vsel %vm698, 1, 0
  %v829 = vsel %vm699, 1, 0
  %v830 = vsel %vm700, 1, 0
  %vm831 = vcmp.eq.s32.totalorder %v815, 1
  %vm832 = vcmp.eq.s32.totalorder %v816, 1
  %vm833 = vcmp.eq.s32.totalorder %v817, 1
  %vm834 = vcmp.eq.s32.totalorder %v818, 1
  %vm835 = vcmp.eq.s32.totalorder %v819, 1
  %vm836 = vcmp.eq.s32.totalorder %v820, 1
  %vm837 = vcmp.eq.s32.totalorder %v821, 1
  %vm838 = vcmp.eq.s32.totalorder %v822, 1
  %vm839 = vcmp.eq.s32.totalorder %v823, 1
  %vm840 = vcmp.eq.s32.totalorder %v824, 1
  %vm841 = vcmp.eq.s32.totalorder %v825, 1
  %vm842 = vcmp.eq.s32.totalorder %v826, 1
  %vm843 = vcmp.eq.s32.totalorder %v827, 1
  %vm844 = vcmp.eq.s32.totalorder %v828, 1
  %vm845 = vcmp.eq.s32.totalorder %v829, 1
  %vm846 = vcmp.eq.s32.totalorder %v830, 1
  %v847 = vsel %vm831, 0.0, %v813
  %v848 = vsel %vm832, 0.0, %v812
  %v849 = vsel %vm833, 0.0, %v811
  %v850 = vsel %vm834, 0.0, %v810
  %v851 = vsel %vm835, 0.0, %v809
  %v852 = vsel %vm836, 0.0, %v808
  %v853 = vsel %vm837, 0.0, %v807
  %v854 = vsel %vm838, 0.0, %v806
  %v855 = vsel %vm839, 0.0, %v805
  %v856 = vsel %vm840, 0.0, %v804
  %v857 = vsel %vm841, 0.0, %v803
  %v858 = vsel %vm842, 0.0, %v802
  %v859 = vsel %vm843, 0.0, %v801
  %v860 = vsel %vm844, 0.0, %v800
  %v861 = vsel %vm845, 0.0, %v799
  %v862 = vsel %vm846, 0.0, %v814
  %v863 = vadd.f32 %v766, %v372
  %v864 = vadd.f32 %v767, %v374
  %v865 = vadd.f32 %v768, %v377
  %v866 = vadd.f32 %v769, %v379
  %v867 = vadd.f32 %v770, %v382
  %v868 = vadd.f32 %v771, %v384
  %v869 = vadd.f32 %v772, %v387
  %v870 = vadd.f32 %v773, %v389
  %v871 = vadd.f32 %v774, %v392
  %v872 = vadd.f32 %v775, %v394
  %v873 = vadd.f32 %v776, %v397
  %v874 = vadd.f32 %v777, %v399
  %v875 = vadd.f32 %v778, %v402
  %v876 = vadd.f32 %v779, %v404
  %v877 = vadd.f32 %v780, %v407
  %v878 = vadd.f32 %v781, %v409
  %v879 = vadd.f32 %v863, %v847
  %v880 = vadd.f32 %v864, %v848
  %v881 = vadd.f32 %v865, %v849
  %v882 = vadd.f32 %v866, %v850
  %v883 = vadd.f32 %v867, %v851
  %v884 = vadd.f32 %v868, %v852
  %v885 = vadd.f32 %v869, %v853
  %v886 = vadd.f32 %v870, %v854
  %v887 = vadd.f32 %v871, %v855
  %v888 = vadd.f32 %v872, %v856
  %v889 = vadd.f32 %v873, %v857
  %v890 = vadd.f32 %v874, %v858
  %v891 = vadd.f32 %v875, %v859
  %v892 = vadd.f32 %v876, %v860
  %v893 = vadd.f32 %v877, %v861
  %v894 = vadd.f32 %v878, %v862
  %v895 = vld [vmem:[%s4] sm:$0x1]
  %v896 = vperm.slane %v895, 0
  %v897 = vadd.f32 %v879, %v896
  %v898 = vadd.f32 %v880, %v896
  %v899 = vadd.f32 %v881, %v896
  %v900 = vadd.f32 %v882, %v896
  %v901 = vadd.f32 %v883, %v896
  %v902 = vadd.f32 %v884, %v896
  %v903 = vadd.f32 %v885, %v896
  %v904 = vadd.f32 %v886, %v896
  %v905 = vadd.f32 %v887, %v896
  %v906 = vadd.f32 %v888, %v896
  %v907 = vadd.f32 %v889, %v896
  %v908 = vadd.f32 %v890, %v896
  %v909 = vadd.f32 %v891, %v896
  %v910 = vadd.f32 %v892, %v896
  %v911 = vadd.f32 %v893, %v896
  %v912 = vadd.f32 %v894, %v896
  %v913 = vmax.f32 %v897, 0.0
  %v914 = vmax.f32 %v898, 0.0
  %v915 = vmax.f32 %v899, 0.0
  %v916 = vmax.f32 %v900, 0.0
  %v917 = vmax.f32 %v901, 0.0
  %v918 = vmax.f32 %v902, 0.0
  %v919 = vmax.f32 %v903, 0.0
  %v920 = vmax.f32 %v904, 0.0
  %v921 = vmax.f32 %v905, 0.0
  %v922 = vmax.f32 %v906, 0.0
  %v923 = vmax.f32 %v907, 0.0
  %v924 = vmax.f32 %v908, 0.0
  %v925 = vmax.f32 %v909, 0.0
  %v926 = vmax.f32 %v910, 0.0
  %v927 = vmax.f32 %v911, 0.0
  %v928 = vmax.f32 %v912, 0.0
  %v929 = vpack.c.bf16 %v914, %v913
  %v930 = vpack.c.bf16 %v916, %v915
  %v931 = vpack.c.bf16 %v918, %v917
  %v932 = vpack.c.bf16 %v920, %v919
  %v933 = vpack.c.bf16 %v922, %v921
  %v934 = vpack.c.bf16 %v924, %v923
  %v935 = vpack.c.bf16 %v926, %v925
  %v936 = vpack.c.bf16 %v928, %v927
  %v937 = vld [vmem:[%s3] sm:$0xf]
  %v938 = vld [vmem:[%s3 + $0x4] sm:$0xf]
  %v939 = vld [vmem:[%s3 + $0x8] sm:$0xf]
  %v940 = vld [vmem:[%s3 + $0xc] sm:$0xf]
  %v941 = vld [vmem:[%s3 + $0x10] sm:$0xf]
  %v942 = vld [vmem:[%s3 + $0x14] sm:$0xf]
  %v943 = vld [vmem:[%s3 + $0x18] sm:$0xf]
  %v944 = vld [vmem:[%s3 + $0x1c] sm:$0xf]
  %v945 = vld [vmem:[%s3 + $0x20] sm:$0xf]
  %v946 = vld [vmem:[%s3 + $0x24] sm:$0xf]
  %v947 = vld [vmem:[%s3 + $0x28] sm:$0xf]
  %v948 = vld [vmem:[%s3 + $0x2c] sm:$0xf]
  %v949 = vld [vmem:[%s3 + $0x30] sm:$0xf]
  %v950 = vld [vmem:[%s3 + $0x34] sm:$0xf]
  %v951 = vld [vmem:[%s3 + $0x38] sm:$0xf]
  %v952 = vld [vmem:[%s3 + $0x3c] sm:$0xf]
  %v953 = vld [vmem:[%s4 + $0x1] sm:$0x1]
  %v954 = vperm.slane %v953, 0
  %v971 = vunpack.c.l.b16 %v937
  %v972 = vunpack.c.l.b16 %v938
  %v973 = vunpack.c.l.b16 %v939
  %v974 = vunpack.c.l.b16 %v940
  %v975 = vunpack.c.l.b16 %v941
  %v976 = vunpack.c.l.b16 %v942
  %v977 = vunpack.c.l.b16 %v943
  %v978 = vunpack.c.l.b16 %v944
  %v979 = vunpack.c.l.b16 %v945
  %v980 = vunpack.c.l.b16 %v946
  %v981 = vunpack.c.l.b16 %v947
  %v982 = vunpack.c.l.b16 %v948
  %v983 = vunpack.c.l.b16 %v949
  %v984 = vunpack.c.l.b16 %v950
  %v985 = vunpack.c.l.b16 %v951
  %v986 = vunpack.c.l.b16 %v952
  %v987 = vpack.c.b16 %v972, %v971
  %v988 = vpack.c.b16 %v974, %v973
  %v989 = vpack.c.b16 %v976, %v975
  %v990 = vpack.c.b16 %v978, %v977
  %v991 = vpack.c.b16 %v980, %v979
  %v992 = vpack.c.b16 %v982, %v981
  %v993 = vpack.c.b16 %v984, %v983
  %v994 = vpack.c.b16 %v986, %v985
  %1003 = vmatpush.bf16.msra.mxu0 %v994
  %1004 = vmatpush.bf16.msra.mxu0 %v993
  %1005 = vmatpush.bf16.msra.mxu0 %v992
  %1006 = vmatpush.bf16.msra.mxu0 %v991
  %1007 = vmatpush.bf16.msra.mxu0 %v990
  %1008 = vmatpush.bf16.msra.mxu0 %v989
  %1009 = vmatpush.bf16.msra.mxu0 %v988
  %1010 = vmatpush.bf16.msra.mxu0 %v987
  %1011 = vmatmul.bf16.gmra.mxu0 %v929
  %v1012 = vpop.f32.mrf.mxu0
  %v1013 = vadd.f32 %v954, %v1012
  %v1014 = vpop.f32.mrf.mxu0
  %v1015 = vadd.f32 %v954, %v1014
  %1016 = vmatmul.bf16.gmra.mxu0 %v930
  %v1017 = vpop.f32.mrf.mxu0
  %v1018 = vadd.f32 %v954, %v1017
  %v1019 = vpop.f32.mrf.mxu0
  %v1020 = vadd.f32 %v954, %v1019
  %1021 = vmatmul.bf16.gmra.mxu0 %v931
  %v1022 = vpop.f32.mrf.mxu0
  %v1023 = vadd.f32 %v954, %v1022
  %v1024 = vpop.f32.mrf.mxu0
  %v1025 = vadd.f32 %v954, %v1024
  %1026 = vmatmul.bf16.gmra.mxu0 %v932
  %v1027 = vpop.f32.mrf.mxu0
  %v1028 = vadd.f32 %v954, %v1027
  %v1029 = vpop.f32.mrf.mxu0
  %v1030 = vadd.f32 %v954, %v1029
  %1031 = vmatmul.bf16.gmra.mxu0 %v933
  %v1032 = vpop.f32.mrf.mxu0
  %v1033 = vadd.f32 %v954, %v1032
  %v1034 = vpop.f32.mrf.mxu0
  %v1035 = vadd.f32 %v954, %v1034
  %1036 = vmatmul.bf16.gmra.mxu0 %v934
  %v1037 = vpop.f32.mrf.mxu0
  %v1038 = vadd.f32 %v954, %v1037
  %v1039 = vpop.f32.mrf.mxu0
  %v1040 = vadd.f32 %v954, %v1039
  %1041 = vmatmul.bf16.gmra.mxu0 %v935
  %v1042 = vpop.f32.mrf.mxu0
  %v1043 = vadd.f32 %v954, %v1042
  %v1044 = vpop.f32.mrf.mxu0
  %v1045 = vadd.f32 %v954, %v1044
  %1046 = vmatmul.bf16.gmra.mxu0 %v936
  %v1047 = vpop.f32.mrf.mxu0
  %v1048 = vadd.f32 %v954, %v1047
  %v1049 = vpop.f32.mrf.mxu0
  %v1050 = vadd.f32 %v954, %v1049
  %1051 = vdwg.mxu0
  %vm1052 = vcmask 130048
  %1053 = vst.msk [vmem:[%s5] sm:$0xff] %vm1052, %v1013
  %1054 = vst.msk [vmem:[%s5 + $0x8] sm:$0xff] %vm1052, %v1015
  %1055 = vst.msk [vmem:[%s5 + $0x10] sm:$0xff] %vm1052, %v1018
  %1056 = vst.msk [vmem:[%s5 + $0x18] sm:$0xff] %vm1052, %v1020
  %1057 = vst.msk [vmem:[%s5 + $0x20] sm:$0xff] %vm1052, %v1023
  %1058 = vst.msk [vmem:[%s5 + $0x28] sm:$0xff] %vm1052, %v1025
  %1059 = vst.msk [vmem:[%s5 + $0x30] sm:$0xff] %vm1052, %v1028
  %1060 = vst.msk [vmem:[%s5 + $0x38] sm:$0xff] %vm1052, %v1030
  %1061 = vst.msk [vmem:[%s5 + $0x40] sm:$0xff] %vm1052, %v1033
  %1062 = vst.msk [vmem:[%s5 + $0x48] sm:$0xff] %vm1052, %v1035
  %1063 = vst.msk [vmem:[%s5 + $0x50] sm:$0xff] %vm1052, %v1038
  %1064 = vst.msk [vmem:[%s5 + $0x58] sm:$0xff] %vm1052, %v1040
  %1065 = vst.msk [vmem:[%s5 + $0x60] sm:$0xff] %vm1052, %v1043
  %1066 = vst.msk [vmem:[%s5 + $0x68] sm:$0xff] %vm1052, %v1045
  %1067 = vst.msk [vmem:[%s5 + $0x70] sm:$0xff] %vm1052, %v1048
  %1068 = vst.msk [vmem:[%s5 + $0x78] sm:$0xff] %vm1052, %v1050
  // Predicated region
  $region22: #{tpu_custom_call.1} parent=0 // pred_check
    _
  $region23: #{tpu_custom_call.1} parent=0 // pred_check_branch
    %1070 = sbr.rel (0) target = $region25
  $region24: #{tpu_custom_call.1} parent=0 // pred_region
    _
  $region25: #{tpu_custom_call.1} parent=0 // pred_fallthru
    _
  // Predicated region
  $region26: #{tpu_custom_call.1} parent=0 // pred_check
    _
  $region27: #{tpu_custom_call.1} parent=0 // pred_check_branch
    %1072 = sbr.rel (0) target = $region29
  $region28: #{tpu_custom_call.1} parent=0 // pred_region
    _
  $region29: #{tpu_custom_call.1} parent=0 // pred_fallthru
    _

</llo_original>
